<compile_context>
chip_gen: v5e
topology: v5e:2x2
jax: 0.10.0
libtpu: 0.0.40
codegen_flags: <defaults>
</compile_context>

<pallas_src>
import functools

import jax
import jax.numpy as jnp
from jax.experimental import pallas as pl
from jax.experimental.pallas import tpu as pltpu

EPS = 1e-5  # PyTorch nn.LayerNorm default eps


def residual_prenorm_linear_kernel(x_ref, w_ref, b_ref, o_ref):
    """One row-tile of: out = Linear(LayerNorm(x)) + x.

    x_ref: (TILE_R, D)  input rows
    w_ref: (D, D)       folded weight, layout [in, out] (= gamma[:,None] * W.T)
    b_ref: (1, D)       folded bias    (= beta @ W.T + b), float32
    o_ref: (TILE_R, D)  output rows
    """
    xf = x_ref[...].astype(jnp.float32)

    # --- LayerNorm statistics over last axis (biased variance, like PyTorch) ---
    mean = jnp.mean(xf, axis=-1, keepdims=True)
    xc = xf - mean
    var = jnp.mean(xc * xc, axis=-1, keepdims=True)
    inv = jax.lax.rsqrt(var + EPS)

    # gamma/beta are folded into w_ref/b_ref, so only the normalized rows hit
    # the MXU.  Cast operands to the weight dtype (f32 here; bf16 if weights
    # are supplied in bf16) while accumulating in f32.
    y = (xc * inv).astype(w_ref.dtype)
    out = jnp.dot(y, w_ref[...], preferred_element_type=jnp.float32) + b_ref[...]

    # --- Residual: fn(x) + x ---
    o_ref[...] = (out + xf).astype(o_ref.dtype)


def _round_up(n, m):
    return ((n + m - 1) // m) * m


@functools.partial(jax.jit, static_argnames=("tile_r",))
def residual_forward(x, gamma, beta, w, b, *, tile_r=256):
    """x: [B, S, D].  Returns fn(x) + x with fn = Linear(D, D) o LayerNorm(D).

    gamma/beta: LayerNorm weight/bias, shape [D]
    w:          Linear weight, PyTorch layout [out=D, in=D]
    b:          Linear bias, shape [D]
    """
    B, S, D = x.shape
    rows = B * S
    x2d = x.reshape(rows, D)

    # ---- trace-time parameter folding (one-time XLA work, not per-token) ----
    # y @ W.T + b  with  y = xn*gamma + beta   ==>   xn @ (gamma[:,None]*W.T) + (beta@W.T + b)
    w_t = jnp.transpose(w)                                   # [in, out]
    w_eff = (gamma[:, None].astype(jnp.float32) * w_t.astype(jnp.float32)).astype(w.dtype)
    b_eff = (beta.astype(jnp.float32) @ w_t.astype(jnp.float32)
             + b.astype(jnp.float32)).reshape(1, D)

    # ---- row tiling (multiple of 8 for f32 sublanes; pad rows if needed) ----
    tile_r = min(tile_r, _round_up(rows, 8))
    rows_p = _round_up(rows, tile_r)
    if rows_p != rows:
        x2d = jnp.pad(x2d, ((0, rows_p - rows), (0, 0)))
    grid = (rows_p // tile_r,)

    cost = pl.CostEstimate(
        flops=2 * rows_p * D * D + 10 * rows_p * D,
        transcendentals=rows_p,                              # one rsqrt per row
        bytes_accessed=2 * rows_p * D * x.dtype.itemsize
        + D * D * w.dtype.itemsize + D * 4,
    )

    out2d = pl.pallas_call(
        residual_prenorm_linear_kernel,
        out_shape=jax.ShapeDtypeStruct((rows_p, D), x.dtype),
        grid_spec=pltpu.PrefetchScalarGridSpec(
            num_scalar_prefetch=0,
            grid=grid,
            in_specs=[
                pl.BlockSpec((tile_r, D), lambda i: (i, 0)),  # x rows: tiled
                pl.BlockSpec((D, D), lambda i: (0, 0)),       # W: VMEM-resident
                pl.BlockSpec((1, D), lambda i: (0, 0)),       # bias: VMEM-resident
            ],
            out_specs=pl.BlockSpec((tile_r, D), lambda i: (i, 0)),
        ),
        compiler_params=pltpu.CompilerParams(
            dimension_semantics=("parallel",),                # rows are independent
        ),
        cost_estimate=cost,
    )(x2d, w_eff, b_eff)

    return out2d[:rows].reshape(B, S, D)


def reference_forward(x, gamma, beta, w, b):
    """Pure-JAX reference mirroring PyTorch Residual(Linear o LayerNorm)."""
    mean = jnp.mean(x, axis=-1, keepdims=True)
    var = jnp.mean((x - mean) ** 2, axis=-1, keepdims=True)
    y = (x - mean) / jnp.sqrt(var + EPS) * gamma + beta
    return jnp.einsum("bsd,od->bso", y, w) + b + x            # fn(x) + x


if __name__ == "__main__":
    # Small but lane-dense shapes: D multiple of 128, several row tiles.
    B, S, D = 2, 256, 128
    key = jax.random.PRNGKey(0)
    kx, kw, kb, kg, kbeta = jax.random.split(key, 5)

    x = jax.random.normal(kx, (B, S, D), dtype=jnp.float32)

    # Deterministic synthetic params (shapes per nn.LayerNorm(D) / nn.Linear(D, D)).
    gamma = 1.0 + 0.1 * jax.random.normal(kg, (D,), dtype=jnp.float32)
    beta = 0.1 * jax.random.normal(kbeta, (D,), dtype=jnp.float32)
    w = jax.random.normal(kw, (D, D), dtype=jnp.float32) * (1.0 / jnp.sqrt(D))
    b = jax.random.normal(kb, (D,), dtype=jnp.float32) * 0.01

    out = residual_forward(x, gamma, beta, w, b, tile_r=256)
    out = jax.block_until_ready(out)

    ref = reference_forward(x, gamma, beta, w, b)
    assert out.shape == (B, S, D)
    assert jnp.allclose(out, ref, atol=2e-4, rtol=2e-4), "mismatch vs reference"

    print("KERNEL_OK")
</pallas_src>

<mosaic_0001>
module attributes {stable_mosaic.version = 11 : i64} {
  func.func @residual_prenorm_linear_kernel(%arg0: i32, %arg1: memref<256x128xf32, #tpu.memory_space<vmem>>, %arg2: memref<128x128xf32, #tpu.memory_space<vmem>>, %arg3: memref<1x128xf32, #tpu.memory_space<vmem>>, %arg4: memref<256x128xf32, #tpu.memory_space<vmem>>) attributes {dimension_semantics = [#tpu.dimension_semantics<parallel>], iteration_bounds = array<i64: 2>, scalar_prefetch = 0 : i64, scratch_operands = 0 : i64, tpu.core_type = #tpu.core_type<tc>, window_params = [{transform_indices = @transform_0, window_bounds = array<i64: 256, 128>}, {pipeline_mode = #tpu.pipeline_mode<synchronous>, transform_indices = @transform_1, window_bounds = array<i64: 128, 128>}, {pipeline_mode = #tpu.pipeline_mode<synchronous>, transform_indices = @transform_2, window_bounds = array<i64: 1, 128>}, {transform_indices = @transform_3, window_bounds = array<i64: 256, 128>}]} {
    %c0 = arith.constant 0 : index
    %c0_0 = arith.constant 0 : index
    %0 = vector.load %arg1[%c0, %c0_0] : memref<256x128xf32, #tpu.memory_space<vmem>>, vector<256x128xf32>
    %cst = arith.constant dense<0.000000e+00> : vector<256xf32>
    %1 = vector.multi_reduction <add>, %0, %cst [1] : vector<256x128xf32> to vector<256xf32>
    %2 = vector.shape_cast %1 : vector<256xf32> to vector<256x1xf32>
    %cst_1 = arith.constant 1.280000e+02 : f32
    %3 = vector.broadcast %cst_1 : f32 to vector<256x1xf32>
    %4 = arith.divf %2, %3 : vector<256x1xf32>
    %5 = vector.broadcast %4 : vector<256x1xf32> to vector<256x128xf32>
    %6 = arith.subf %0, %5 : vector<256x128xf32>
    %7 = arith.mulf %6, %6 : vector<256x128xf32>
    %cst_2 = arith.constant dense<0.000000e+00> : vector<256xf32>
    %8 = vector.multi_reduction <add>, %7, %cst_2 [1] : vector<256x128xf32> to vector<256xf32>
    %9 = vector.shape_cast %8 : vector<256xf32> to vector<256x1xf32>
    %cst_3 = arith.constant 1.280000e+02 : f32
    %10 = vector.broadcast %cst_3 : f32 to vector<256x1xf32>
    %11 = arith.divf %9, %10 : vector<256x1xf32>
    %cst_4 = arith.constant 9.99999974E-6 : f32
    %12 = vector.broadcast %cst_4 : f32 to vector<256x1xf32>
    %13 = arith.addf %11, %12 : vector<256x1xf32>
    %14 = math.rsqrt %13 : vector<256x1xf32>
    %15 = vector.broadcast %14 : vector<256x1xf32> to vector<256x128xf32>
    %16 = arith.mulf %6, %15 : vector<256x128xf32>
    %c0_5 = arith.constant 0 : index
    %c0_6 = arith.constant 0 : index
    %17 = vector.load %arg2[%c0_5, %c0_6] : memref<128x128xf32, #tpu.memory_space<vmem>>, vector<128x128xf32>
    %cst_7 = arith.constant dense<0.000000e+00> : vector<256x128xf32>
    %18 = tpu.matmul %16, %17, %cst_7 {dimension_numbers = #tpu.dot_dimension_numbers<[1], [0], [0], [1], [0, 0, 1, 1], [], []>} : vector<256x128xf32>, vector<128x128xf32>, vector<256x128xf32> -> vector<256x128xf32>
    %c0_8 = arith.constant 0 : index
    %c0_9 = arith.constant 0 : index
    %19 = vector.load %arg3[%c0_8, %c0_9] : memref<1x128xf32, #tpu.memory_space<vmem>>, vector<1x128xf32>
    %20 = vector.broadcast %19 : vector<1x128xf32> to vector<256x128xf32>
    %21 = arith.addf %18, %20 : vector<256x128xf32>
    %22 = arith.addf %21, %0 : vector<256x128xf32>
    %c0_10 = arith.constant 0 : index
    %c0_11 = arith.constant 0 : index
    %23 = vector.load %arg4[%c0_10, %c0_11] : memref<256x128xf32, #tpu.memory_space<vmem>>, vector<256x128xf32>
    tpu.vector_store %arg4[%c0_10, %c0_11], %22 {strides = array<i32>} : memref<256x128xf32, #tpu.memory_space<vmem>>, vector<256x128xf32>,
    return
  }
  func.func @transform_0(%arg0: i32) -> (i32, i32) {
    %c0_i32 = arith.constant 0 : i32
    %c0_i32_0 = arith.constant 0 : i32
    return %arg0, %c0_i32 : i32, i32
  }
  func.func @transform_1(%arg0: i32) -> (i32, i32) {
    %c0_i32 = arith.constant 0 : i32
    %c0_i32_0 = arith.constant 0 : i32
    %c0_i32_1 = arith.constant 0 : i32
    return %c0_i32, %c0_i32_0 : i32, i32
  }
  func.func @transform_2(%arg0: i32) -> (i32, i32) {
    %c0_i32 = arith.constant 0 : i32
    %c0_i32_0 = arith.constant 0 : i32
    %c0_i32_1 = arith.constant 0 : i32
    return %c0_i32, %c0_i32_0 : i32, i32
  }
  func.func @transform_3(%arg0: i32) -> (i32, i32) {
    %c0_i32 = arith.constant 0 : i32
    %c0_i32_0 = arith.constant 0 : i32
    return %arg0, %c0_i32 : i32, i32
  }
}

</mosaic_0001>

<llo_original>
// kernel: residual_forward.1
$region0: #{residual_forward.1}
  #allocation0 [shape = 'u32[]', space=smem, size = 0x4, offset = 0x4, fixed_abs, tag = 'smem constant byte address 0x4 - core index']
  #allocation1 [shape = 'u32[72,128]{1,0:T(1,128)}', space=vmem, size = 0x9000, scoped, tag = 'internal scratch']
  %s0 = inlined_call_operand.vmem [shape: f32[512,128], index: 0, kind: input, shape index: {}]
  %s1 = inlined_call_operand.vmem [shape: f32[128,128], index: 1, kind: input, shape index: {}]
  %s2 = inlined_call_operand.vmem [shape: f32[1,128], index: 2, kind: input, shape index: {}]
  %s3 = inlined_call_operand.hbm [shape: f32[512,128], index: 3, kind: output, shape index: {}]
  %s4 = sld [smem:[#allocation0]]
  $region45: #{residual_forward.1} parent=0
    _
  %s6 = ssub.s32 1, %s4
  %s7 = scalar_select 0, %s6, %s4
  $region1: #{residual_forward.1} parent=0
    #allocation2 [shape = 'u8[262144]{0}', space=vmem, size = 0x40000, scoped, tag = 'output window, operand 0']
    #allocation3 [shape = 's32[2]{0}', space=sflag, size = 0x8, scoped, tag = 'scoped memory for residual_forward.1']
    %8 = vsyncpa [#allocation3], 0
    %s9 = scalar_lea.sflag [#allocation3], 1
    %10 = vsyncpa %s9, 0
    loop: start=0, step=1, limit=4
    $region2: #{residual_forward.1} parent=1 // loop_pre_header
      _
    $region3: #{residual_forward.1} parent=1 // loop_header
      %s12 = sphi 0, %s16
      %p13 = scmp.ge.s32.totalorder %s12, 4
      %s22 = sphi 0, %s24
      %s25 = sphi 0, %s22
      %s26 = sphi 0, %s25
      %s42 = sphi 0, %s26
      %s46 = sphi 0, %s46
      %s48 = sphi 0, %s46
      %s49 = sphi 0, %s48
      %s63 = sphi 0, %s49
      %s67 = sphi 0, %s67
      %s69 = sphi 0, %s67
      %s70 = sphi 0, %s69
      %s84 = sphi 0, %s70
      %s90 = sphi 0, %s92
      %s93 = sphi 0, %s90
      %s94 = sphi 0, %s93
      %s110 = sphi 0, %s94
    $region4: #{residual_forward.1} parent=1 // loop_header_branch
      %15 = sbr.rel (%p13) target = $region8
    $region5: #{residual_forward.1} parent=1 // loop_body
      %s17 = ssub.s32 %s12, 1
      %s18 = ssub.s32 %s12, 2
      %s19 = sadd.s32 %s12, 1
      %s20 = ssub.s32 %s12, %s19
      %p21 = scmp.eq.s32.totalorder %s20, 0
      %s23 = sadd.s32 %s22, 1
      %s24 = scalar_select %p21, %s22, %s23
      %p27 = pneg %p21
      %p28 = scmp.eq.s32.totalorder %s12, 1
      %p29 = por %p27, %p28
      %p30 = scmp.ne.s32.totalorder %s22, %s25
      %p31 = scmp.eq.s32.totalorder %s12, 0
      %p32 = por %p30, %p31
      %p33 = scmp.ne.s32.totalorder %s22, %s25
      %p34 = scmp.eq.s32.totalorder %s17, 1
      %p35 = por %p33, %p34
      %p36 = scmp.ne.s32.totalorder %s25, %s26
      %p37 = scmp.eq.s32.totalorder %s17, 0
      %p38 = por %p36, %p37
      %p39 = scmp.ne.s32.totalorder %s25, %s26
      %p40 = scmp.eq.s32.totalorder %s18, 1
      %p41 = por %p39, %p40
      %p43 = scmp.ne.s32.totalorder %s26, %s42
      %p44 = scmp.eq.s32.totalorder %s18, 0
      %p45 = por %p43, %p44
      %s47 = sadd.s32 %s46, 1
      %p50 = scmp.eq.s32.totalorder %s12, 1
      %p51 = scmp.ne.s32.totalorder %s46, %s48
      %p52 = scmp.eq.s32.totalorder %s12, 0
      %p53 = por %p51, %p52
      %p54 = scmp.ne.s32.totalorder %s46, %s48
      %p55 = scmp.eq.s32.totalorder %s17, 1
      %p56 = por %p54, %p55
      %p57 = scmp.ne.s32.totalorder %s48, %s49
      %p58 = scmp.eq.s32.totalorder %s17, 0
      %p59 = por %p57, %p58
      %p60 = scmp.ne.s32.totalorder %s48, %s49
      %p61 = scmp.eq.s32.totalorder %s18, 1
      %p62 = por %p60, %p61
      %p64 = scmp.ne.s32.totalorder %s49, %s63
      %p65 = scmp.eq.s32.totalorder %s18, 0
      %p66 = por %p64, %p65
      %s68 = sadd.s32 %s67, 1
      %p71 = scmp.eq.s32.totalorder %s12, 1
      %p72 = scmp.ne.s32.totalorder %s67, %s69
      %p73 = scmp.eq.s32.totalorder %s12, 0
      %p74 = por %p72, %p73
      %p75 = scmp.ne.s32.totalorder %s67, %s69
      %p76 = scmp.eq.s32.totalorder %s17, 1
      %p77 = por %p75, %p76
      %p78 = scmp.ne.s32.totalorder %s69, %s70
      %p79 = scmp.eq.s32.totalorder %s17, 0
      %p80 = por %p78, %p79
      %p81 = scmp.ne.s32.totalorder %s69, %s70
      %p82 = scmp.eq.s32.totalorder %s18, 1
      %p83 = por %p81, %p82
      %p85 = scmp.ne.s32.totalorder %s70, %s84
      %p86 = scmp.eq.s32.totalorder %s18, 0
      %p87 = por %p85, %p86
      %s88 = ssub.s32 %s12, %s19
      %p89 = scmp.eq.s32.totalorder %s88, 0
      %s91 = sadd.s32 %s90, 1
      %s92 = scalar_select %p89, %s90, %s91
      %p95 = pneg %p89
      %p96 = scmp.eq.s32.totalorder %s12, 1
      %p97 = por %p95, %p96
      %p98 = scmp.ne.s32.totalorder %s90, %s93
      %p99 = scmp.eq.s32.totalorder %s12, 0
      %p100 = por %p98, %p99
      %p101 = scmp.ne.s32.totalorder %s90, %s93
      %p102 = scmp.eq.s32.totalorder %s17, 1
      %p103 = por %p101, %p102
      %p104 = scmp.ne.s32.totalorder %s93, %s94
      %p105 = scmp.eq.s32.totalorder %s17, 0
      %p106 = por %p104, %p105
      %p107 = scmp.ne.s32.totalorder %s93, %s94
      %p108 = scmp.eq.s32.totalorder %s18, 1
      %p109 = por %p107, %p108
      %p111 = scmp.ne.s32.totalorder %s94, %s110
      %p112 = scmp.eq.s32.totalorder %s18, 0
      %p113 = por %p111, %p112
      %p114 = scmp.le.s32.totalorder 1, %s12
      %p115 = scmp.lt.s32.totalorder %s12, 3
      %p116 = pnand %p114, %p115
      %p117 = pneg %p116
      // Predicated region
      $region9: #{residual_forward.1} parent=5 // pred_check
        _
      $region10: #{residual_forward.1} parent=5 // pred_check_branch
        %119 = sbr.rel (%p116) target = $region12
      $region11: #{residual_forward.1} parent=5 // pred_region
        %s120 = ssub.s32 %s12, 1
        // Predicated region
        $region13: #{residual_forward.1} parent=11 // pred_check
          %p121 = pneg %p59
        $region14: #{residual_forward.1} parent=11 // pred_check_branch
          %123 = sbr.rel (%p121) target = $region16
        $region15: #{residual_forward.1} parent=11 // pred_region
          _
        $region16: #{residual_forward.1} parent=11 // pred_fallthru
          _
        // Predicated region
        $region17: #{residual_forward.1} parent=11 // pred_check
          %p124 = pneg %p80
        $region18: #{residual_forward.1} parent=11 // pred_check_branch
          %126 = sbr.rel (%p124) target = $region20
        $region19: #{residual_forward.1} parent=11 // pred_region
          _
        $region20: #{residual_forward.1} parent=11 // pred_fallthru
          _
      $region12: #{residual_forward.1} parent=5 // pred_fallthru
        _
      %p127 = scmp.lt.s32.totalorder %s12, 2
      // Predicated region
      $region21: #{residual_forward.1} parent=5 // pred_check
        %p128 = pneg %p127
      $region22: #{residual_forward.1} parent=5 // pred_check_branch
        %130 = sbr.rel (%p128) target = $region24
      $region23: #{residual_forward.1} parent=5 // pred_region
        // Predicated region
        $region25: #{residual_forward.1} parent=23 // pred_check
          %p131 = pneg %p32
        $region26: #{residual_forward.1} parent=23 // pred_check_branch
          %133 = sbr.rel (%p131) target = $region28
        $region27: #{residual_forward.1} parent=23 // pred_region
          %s134 = smul.u32 32, %s12
          %p135 = scmp.lt.s32.totalorder %s134, 63
          %s136 = scalar_select %p135, %s134, 63
          %s137 = smul.addr %s136, 8
          %s138 = scalar_lea.vmem %s0, %s137
          %s139 = smul.u32 32, %s12
        $region28: #{residual_forward.1} parent=23 // pred_fallthru
          _
      $region24: #{residual_forward.1} parent=5 // pred_fallthru
        _
      %p140 = scmp.le.s32.totalorder 1, %s12
      %p141 = scmp.lt.s32.totalorder %s12, 3
      %p142 = pnand %p140, %p141
      %p143 = pneg %p142
      // Predicated region
      $region29: #{residual_forward.1} parent=5 // pred_check
        _
      $region30: #{residual_forward.1} parent=5 // pred_check_branch
        %145 = sbr.rel (%p142) target = $region32
      $region31: #{residual_forward.1} parent=5 // pred_region
        %s146 = ssub.s32 %s12, 1
        %s147 = smul.u32 32, %s17
        %p148 = scmp.lt.s32.totalorder %s147, 63
        %s149 = scalar_select %p148, %s147, 63
        %s150 = smul.addr %s149, 8
        %s151 = scalar_lea.vmem %s0, %s150
        %p152 = pneg %p38
        %p153 = pneg %p35
        %p154 = pneg %p59
        %p155 = pneg %p56
        %p156 = pneg %p80
        %p157 = pneg %p77
        %p158 = pneg %p106
        %p159 = pneg %p103
        %s160 = sand.u32 %s93, 1
        %s161 = scalar_lea.sflag [#allocation3], %s160
        %s162 = sand.u32 %s93, 1
        %s163 = smul.addr %s162, 256
        %s164 = scalar_lea.vmem [#allocation2], %s163
        %s165 = smul.u32 32, %s17
        %p166 = scmp.lt.s32.totalorder %s165, 63
        %s167 = scalar_select %p166, %s165, 63
        %s168 = smul.addr %s167, 8
        %s169 = scalar_lea.vmem %s0, %s168
        %s170 = smul.u32 32, %s17
        %s171 = smul.u32 32, %s17
        %v172 = vld [vmem:[%s169] sm:$0xff]
        %v173 = vld [vmem:[%s169 + $0x8] sm:$0xff]
        %v174 = vld [vmem:[%s169 + $0x10] sm:$0xff]
        %v175 = vld [vmem:[%s169 + $0x18] sm:$0xff]
        %v176 = vld [vmem:[%s169 + $0x20] sm:$0xff]
        %v177 = vld [vmem:[%s169 + $0x28] sm:$0xff]
        %v178 = vld [vmem:[%s169 + $0x30] sm:$0xff]
        %v179 = vld [vmem:[%s169 + $0x38] sm:$0xff]
        %v180 = vld [vmem:[%s169 + $0x40] sm:$0xff]
        %v181 = vld [vmem:[%s169 + $0x48] sm:$0xff]
        %v182 = vld [vmem:[%s169 + $0x50] sm:$0xff]
        %v183 = vld [vmem:[%s169 + $0x58] sm:$0xff]
        %v184 = vld [vmem:[%s169 + $0x60] sm:$0xff]
        %v185 = vld [vmem:[%s169 + $0x68] sm:$0xff]
        %v186 = vld [vmem:[%s169 + $0x70] sm:$0xff]
        %v187 = vld [vmem:[%s169 + $0x78] sm:$0xff]
        %v188 = vld [vmem:[%s169 + $0x80] sm:$0xff]
        %v189 = vld [vmem:[%s169 + $0x88] sm:$0xff]
        %v190 = vld [vmem:[%s169 + $0x90] sm:$0xff]
        %v191 = vld [vmem:[%s169 + $0x98] sm:$0xff]
        %v192 = vld [vmem:[%s169 + $0xa0] sm:$0xff]
        %v193 = vld [vmem:[%s169 + $0xa8] sm:$0xff]
        %v194 = vld [vmem:[%s169 + $0xb0] sm:$0xff]
        %v195 = vld [vmem:[%s169 + $0xb8] sm:$0xff]
        %v196 = vld [vmem:[%s169 + $0xc0] sm:$0xff]
        %v197 = vld [vmem:[%s169 + $0xc8] sm:$0xff]
        %v198 = vld [vmem:[%s169 + $0xd0] sm:$0xff]
        %v199 = vld [vmem:[%s169 + $0xd8] sm:$0xff]
        %v200 = vld [vmem:[%s169 + $0xe0] sm:$0xff]
        %v201 = vld [vmem:[%s169 + $0xe8] sm:$0xff]
        %v202 = vld [vmem:[%s169 + $0xf0] sm:$0xff]
        %v203 = vld [vmem:[%s169 + $0xf8] sm:$0xff]
        %204 = vadd.xlane.f32.xlu0 %v172
        %v205 = vpop.xlane.xlu0 %204
        %206 = vadd.xlane.f32.xlu0 %v173
        %v207 = vpop.xlane.xlu0 %206
        %208 = vadd.xlane.f32.xlu0 %v174
        %v209 = vpop.xlane.xlu0 %208
        %210 = vadd.xlane.f32.xlu0 %v175
        %v211 = vpop.xlane.xlu0 %210
        %212 = vadd.xlane.f32.xlu0 %v176
        %v213 = vpop.xlane.xlu0 %212
        %214 = vadd.xlane.f32.xlu0 %v177
        %v215 = vpop.xlane.xlu0 %214
        %216 = vadd.xlane.f32.xlu0 %v178
        %v217 = vpop.xlane.xlu0 %216
        %218 = vadd.xlane.f32.xlu0 %v179
        %v219 = vpop.xlane.xlu0 %218
        %220 = vadd.xlane.f32.xlu0 %v180
        %v221 = vpop.xlane.xlu0 %220
        %222 = vadd.xlane.f32.xlu0 %v181
        %v223 = vpop.xlane.xlu0 %222
        %224 = vadd.xlane.f32.xlu0 %v182
        %v225 = vpop.xlane.xlu0 %224
        %226 = vadd.xlane.f32.xlu0 %v183
        %v227 = vpop.xlane.xlu0 %226
        %228 = vadd.xlane.f32.xlu0 %v184
        %v229 = vpop.xlane.xlu0 %228
        %230 = vadd.xlane.f32.xlu0 %v185
        %v231 = vpop.xlane.xlu0 %230
        %232 = vadd.xlane.f32.xlu0 %v186
        %v233 = vpop.xlane.xlu0 %232
        %234 = vadd.xlane.f32.xlu0 %v187
        %v235 = vpop.xlane.xlu0 %234
        %236 = vadd.xlane.f32.xlu0 %v188
        %v237 = vpop.xlane.xlu0 %236
        %238 = vadd.xlane.f32.xlu0 %v189
        %v239 = vpop.xlane.xlu0 %238
        %240 = vadd.xlane.f32.xlu0 %v190
        %v241 = vpop.xlane.xlu0 %240
        %242 = vadd.xlane.f32.xlu0 %v191
        %v243 = vpop.xlane.xlu0 %242
        %244 = vadd.xlane.f32.xlu0 %v192
        %v245 = vpop.xlane.xlu0 %244
        %246 = vadd.xlane.f32.xlu0 %v193
        %v247 = vpop.xlane.xlu0 %246
        %248 = vadd.xlane.f32.xlu0 %v194
        %v249 = vpop.xlane.xlu0 %248
        %250 = vadd.xlane.f32.xlu0 %v195
        %v251 = vpop.xlane.xlu0 %250
        %252 = vadd.xlane.f32.xlu0 %v196
        %v253 = vpop.xlane.xlu0 %252
        %254 = vadd.xlane.f32.xlu0 %v197
        %v255 = vpop.xlane.xlu0 %254
        %256 = vadd.xlane.f32.xlu0 %v198
        %v257 = vpop.xlane.xlu0 %256
        %258 = vadd.xlane.f32.xlu0 %v199
        %v259 = vpop.xlane.xlu0 %258
        %260 = vadd.xlane.f32.xlu0 %v200
        %v261 = vpop.xlane.xlu0 %260
        %262 = vadd.xlane.f32.xlu0 %v201
        %v263 = vpop.xlane.xlu0 %262
        %264 = vadd.xlane.f32.xlu0 %v202
        %v265 = vpop.xlane.xlu0 %264
        %266 = vadd.xlane.f32.xlu0 %v203
        %v267 = vpop.xlane.xlu0 %266
        %v268 = vrcp.pop 128.0
        %v269 = vmul.f32 128.0, %v268
        %v270 = vsub.f32 1.0, %v269
        %v271 = vmul.f32 %v268, %v270
        %v272 = vadd.f32 %v268, %v271
        %vm273 = vweird.f32 %v268
        %v274 = vsel %vm273, %v268, %v272
        %v275 = vmul.f32 %v205, %v274
        %v276 = vmul.f32 %v207, %v274
        %v277 = vmul.f32 %v209, %v274
        %v278 = vmul.f32 %v211, %v274
        %v279 = vmul.f32 %v213, %v274
        %v280 = vmul.f32 %v215, %v274
        %v281 = vmul.f32 %v217, %v274
        %v282 = vmul.f32 %v219, %v274
        %v283 = vmul.f32 %v221, %v274
        %v284 = vmul.f32 %v223, %v274
        %v285 = vmul.f32 %v225, %v274
        %v286 = vmul.f32 %v227, %v274
        %v287 = vmul.f32 %v229, %v274
        %v288 = vmul.f32 %v231, %v274
        %v289 = vmul.f32 %v233, %v274
        %v290 = vmul.f32 %v235, %v274
        %v291 = vmul.f32 %v237, %v274
        %v292 = vmul.f32 %v239, %v274
        %v293 = vmul.f32 %v241, %v274
        %v294 = vmul.f32 %v243, %v274
        %v295 = vmul.f32 %v245, %v274
        %v296 = vmul.f32 %v247, %v274
        %v297 = vmul.f32 %v249, %v274
        %v298 = vmul.f32 %v251, %v274
        %v299 = vmul.f32 %v253, %v274
        %v300 = vmul.f32 %v255, %v274
        %v301 = vmul.f32 %v257, %v274
        %v302 = vmul.f32 %v259, %v274
        %v303 = vmul.f32 %v261, %v274
        %v304 = vmul.f32 %v263, %v274
        %v305 = vmul.f32 %v265, %v274
        %v306 = vmul.f32 %v267, %v274
        %v307 = vsub.f32 %v172, %v275
        %v308 = vsub.f32 %v173, %v276
        %v309 = vsub.f32 %v174, %v277
        %v310 = vsub.f32 %v175, %v278
        %v311 = vsub.f32 %v176, %v279
        %v312 = vsub.f32 %v177, %v280
        %v313 = vsub.f32 %v178, %v281
        %v314 = vsub.f32 %v179, %v282
        %v315 = vsub.f32 %v180, %v283
        %v316 = vsub.f32 %v181, %v284
        %v317 = vsub.f32 %v182, %v285
        %v318 = vsub.f32 %v183, %v286
        %v319 = vsub.f32 %v184, %v287
        %v320 = vsub.f32 %v185, %v288
        %v321 = vsub.f32 %v186, %v289
        %v322 = vsub.f32 %v187, %v290
        %v323 = vsub.f32 %v188, %v291
        %v324 = vsub.f32 %v189, %v292
        %v325 = vsub.f32 %v190, %v293
        %v326 = vsub.f32 %v191, %v294
        %v327 = vsub.f32 %v192, %v295
        %v328 = vsub.f32 %v193, %v296
        %v329 = vsub.f32 %v194, %v297
        %v330 = vsub.f32 %v195, %v298
        %v331 = vsub.f32 %v196, %v299
        %v332 = vsub.f32 %v197, %v300
        %v333 = vsub.f32 %v198, %v301
        %v334 = vsub.f32 %v199, %v302
        %v335 = vsub.f32 %v200, %v303
        %v336 = vsub.f32 %v201, %v304
        %v337 = vsub.f32 %v202, %v305
        %v338 = vsub.f32 %v203, %v306
        %v339 = vmul.f32 %v307, %v307
        %v340 = vmul.f32 %v308, %v308
        %v341 = vmul.f32 %v309, %v309
        %v342 = vmul.f32 %v310, %v310
        %v343 = vmul.f32 %v311, %v311
        %v344 = vmul.f32 %v312, %v312
        %v345 = vmul.f32 %v313, %v313
        %v346 = vmul.f32 %v314, %v314
        %v347 = vmul.f32 %v315, %v315
        %v348 = vmul.f32 %v316, %v316
        %v349 = vmul.f32 %v317, %v317
        %v350 = vmul.f32 %v318, %v318
        %v351 = vmul.f32 %v319, %v319
        %v352 = vmul.f32 %v320, %v320
        %v353 = vmul.f32 %v321, %v321
        %v354 = vmul.f32 %v322, %v322
        %v355 = vmul.f32 %v323, %v323
        %v356 = vmul.f32 %v324, %v324
        %v357 = vmul.f32 %v325, %v325
        %v358 = vmul.f32 %v326, %v326
        %v359 = vmul.f32 %v327, %v327
        %v360 = vmul.f32 %v328, %v328
        %v361 = vmul.f32 %v329, %v329
        %v362 = vmul.f32 %v330, %v330
        %v363 = vmul.f32 %v331, %v331
        %v364 = vmul.f32 %v332, %v332
        %v365 = vmul.f32 %v333, %v333
        %v366 = vmul.f32 %v334, %v334
        %v367 = vmul.f32 %v335, %v335
        %v368 = vmul.f32 %v336, %v336
        %v369 = vmul.f32 %v337, %v337
        %v370 = vmul.f32 %v338, %v338
        %371 = vadd.xlane.f32.xlu0 %v339
        %v372 = vpop.xlane.xlu0 %371
        %373 = vadd.xlane.f32.xlu0 %v340
        %v374 = vpop.xlane.xlu0 %373
        %375 = vadd.xlane.f32.xlu0 %v341
        %v376 = vpop.xlane.xlu0 %375
        %377 = vadd.xlane.f32.xlu0 %v342
        %v378 = vpop.xlane.xlu0 %377
        %379 = vadd.xlane.f32.xlu0 %v343
        %v380 = vpop.xlane.xlu0 %379
        %381 = vadd.xlane.f32.xlu0 %v344
        %v382 = vpop.xlane.xlu0 %381
        %383 = vadd.xlane.f32.xlu0 %v345
        %v384 = vpop.xlane.xlu0 %383
        %385 = vadd.xlane.f32.xlu0 %v346
        %v386 = vpop.xlane.xlu0 %385
        %387 = vadd.xlane.f32.xlu0 %v347
        %v388 = vpop.xlane.xlu0 %387
        %389 = vadd.xlane.f32.xlu0 %v348
        %v390 = vpop.xlane.xlu0 %389
        %391 = vadd.xlane.f32.xlu0 %v349
        %v392 = vpop.xlane.xlu0 %391
        %393 = vadd.xlane.f32.xlu0 %v350
        %v394 = vpop.xlane.xlu0 %393
        %395 = vadd.xlane.f32.xlu0 %v351
        %v396 = vpop.xlane.xlu0 %395
        %397 = vadd.xlane.f32.xlu0 %v352
        %v398 = vpop.xlane.xlu0 %397
        %399 = vadd.xlane.f32.xlu0 %v353
        %v400 = vpop.xlane.xlu0 %399
        %401 = vadd.xlane.f32.xlu0 %v354
        %v402 = vpop.xlane.xlu0 %401
        %403 = vadd.xlane.f32.xlu0 %v355
        %v404 = vpop.xlane.xlu0 %403
        %405 = vadd.xlane.f32.xlu0 %v356
        %v406 = vpop.xlane.xlu0 %405
        %407 = vadd.xlane.f32.xlu0 %v357
        %v408 = vpop.xlane.xlu0 %407
        %409 = vadd.xlane.f32.xlu0 %v358
        %v410 = vpop.xlane.xlu0 %409
        %411 = vadd.xlane.f32.xlu0 %v359
        %v412 = vpop.xlane.xlu0 %411
        %413 = vadd.xlane.f32.xlu0 %v360
        %v414 = vpop.xlane.xlu0 %413
        %415 = vadd.xlane.f32.xlu0 %v361
        %v416 = vpop.xlane.xlu0 %415
        %417 = vadd.xlane.f32.xlu0 %v362
        %v418 = vpop.xlane.xlu0 %417
        %419 = vadd.xlane.f32.xlu0 %v363
        %v420 = vpop.xlane.xlu0 %419
        %421 = vadd.xlane.f32.xlu0 %v364
        %v422 = vpop.xlane.xlu0 %421
        %423 = vadd.xlane.f32.xlu0 %v365
        %v424 = vpop.xlane.xlu0 %423
        %425 = vadd.xlane.f32.xlu0 %v366
        %v426 = vpop.xlane.xlu0 %425
        %427 = vadd.xlane.f32.xlu0 %v367
        %v428 = vpop.xlane.xlu0 %427
        %429 = vadd.xlane.f32.xlu0 %v368
        %v430 = vpop.xlane.xlu0 %429
        %431 = vadd.xlane.f32.xlu0 %v369
        %v432 = vpop.xlane.xlu0 %431
        %433 = vadd.xlane.f32.xlu0 %v370
        %v434 = vpop.xlane.xlu0 %433
        %v435 = vmul.f32 %v372, %v274
        %v436 = vmul.f32 %v374, %v274
        %v437 = vmul.f32 %v376, %v274
        %v438 = vmul.f32 %v378, %v274
        %v439 = vmul.f32 %v380, %v274
        %v440 = vmul.f32 %v382, %v274
        %v441 = vmul.f32 %v384, %v274
        %v442 = vmul.f32 %v386, %v274
        %v443 = vmul.f32 %v388, %v274
        %v444 = vmul.f32 %v390, %v274
        %v445 = vmul.f32 %v392, %v274
        %v446 = vmul.f32 %v394, %v274
        %v447 = vmul.f32 %v396, %v274
        %v448 = vmul.f32 %v398, %v274
        %v449 = vmul.f32 %v400, %v274
        %v450 = vmul.f32 %v402, %v274
        %v451 = vmul.f32 %v404, %v274
        %v452 = vmul.f32 %v406, %v274
        %v453 = vmul.f32 %v408, %v274
        %v454 = vmul.f32 %v410, %v274
        %v455 = vmul.f32 %v412, %v274
        %v456 = vmul.f32 %v414, %v274
        %v457 = vmul.f32 %v416, %v274
        %v458 = vmul.f32 %v418, %v274
        %v459 = vmul.f32 %v420, %v274
        %v460 = vmul.f32 %v422, %v274
        %v461 = vmul.f32 %v424, %v274
        %v462 = vmul.f32 %v426, %v274
        %v463 = vmul.f32 %v428, %v274
        %v464 = vmul.f32 %v430, %v274
        %v465 = vmul.f32 %v432, %v274
        %v466 = vmul.f32 %v434, %v274
        %v467 = vadd.f32 %v435, 1e-05
        %v468 = vadd.f32 %v436, 1e-05
        %v469 = vadd.f32 %v437, 1e-05
        %v470 = vadd.f32 %v438, 1e-05
        %v471 = vadd.f32 %v439, 1e-05
        %v472 = vadd.f32 %v440, 1e-05
        %v473 = vadd.f32 %v441, 1e-05
        %v474 = vadd.f32 %v442, 1e-05
        %v475 = vadd.f32 %v443, 1e-05
        %v476 = vadd.f32 %v444, 1e-05
        %v477 = vadd.f32 %v445, 1e-05
        %v478 = vadd.f32 %v446, 1e-05
        %v479 = vadd.f32 %v447, 1e-05
        %v480 = vadd.f32 %v448, 1e-05
        %v481 = vadd.f32 %v449, 1e-05
        %v482 = vadd.f32 %v450, 1e-05
        %v483 = vadd.f32 %v451, 1e-05
        %v484 = vadd.f32 %v452, 1e-05
        %v485 = vadd.f32 %v453, 1e-05
        %v486 = vadd.f32 %v454, 1e-05
        %v487 = vadd.f32 %v455, 1e-05
        %v488 = vadd.f32 %v456, 1e-05
        %v489 = vadd.f32 %v457, 1e-05
        %v490 = vadd.f32 %v458, 1e-05
        %v491 = vadd.f32 %v459, 1e-05
        %v492 = vadd.f32 %v460, 1e-05
        %v493 = vadd.f32 %v461, 1e-05
        %v494 = vadd.f32 %v462, 1e-05
        %v495 = vadd.f32 %v463, 1e-05
        %v496 = vadd.f32 %v464, 1e-05
        %v497 = vadd.f32 %v465, 1e-05
        %v498 = vadd.f32 %v466, 1e-05
        %v499 = vrsqrt.pop %v467
        %v500 = vmul.f32 %v499, %v467
        %v501 = vmul.f32 %v500, %v499
        %v502 = vmul.f32 0.5, %v501
        %v503 = vsub.f32 1.5, %v502
        %v504 = vmul.f32 %v499, %v503
        %vm505 = vweird.f32 %v467
        %vm506 = vweird.f32 %v499
        %vm507 = vmor %vm505, %vm506
        %v508 = vsel %vm507, %v499, %v504
        %v509 = vrsqrt.pop %v468
        %v510 = vmul.f32 %v509, %v468
        %v511 = vmul.f32 %v510, %v509
        %v512 = vmul.f32 0.5, %v511
        %v513 = vsub.f32 1.5, %v512
        %v514 = vmul.f32 %v509, %v513
        %vm515 = vweird.f32 %v468
        %vm516 = vweird.f32 %v509
        %vm517 = vmor %vm515, %vm516
        %v518 = vsel %vm517, %v509, %v514
        %v519 = vrsqrt.pop %v469
        %v520 = vmul.f32 %v519, %v469
        %v521 = vmul.f32 %v520, %v519
        %v522 = vmul.f32 0.5, %v521
        %v523 = vsub.f32 1.5, %v522
        %v524 = vmul.f32 %v519, %v523
        %vm525 = vweird.f32 %v469
        %vm526 = vweird.f32 %v519
        %vm527 = vmor %vm525, %vm526
        %v528 = vsel %vm527, %v519, %v524
        %v529 = vrsqrt.pop %v470
        %v530 = vmul.f32 %v529, %v470
        %v531 = vmul.f32 %v530, %v529
        %v532 = vmul.f32 0.5, %v531
        %v533 = vsub.f32 1.5, %v532
        %v534 = vmul.f32 %v529, %v533
        %vm535 = vweird.f32 %v470
        %vm536 = vweird.f32 %v529
        %vm537 = vmor %vm535, %vm536
        %v538 = vsel %vm537, %v529, %v534
        %v539 = vrsqrt.pop %v471
        %v540 = vmul.f32 %v539, %v471
        %v541 = vmul.f32 %v540, %v539
        %v542 = vmul.f32 0.5, %v541
        %v543 = vsub.f32 1.5, %v542
        %v544 = vmul.f32 %v539, %v543
        %vm545 = vweird.f32 %v471
        %vm546 = vweird.f32 %v539
        %vm547 = vmor %vm545, %vm546
        %v548 = vsel %vm547, %v539, %v544
        %v549 = vrsqrt.pop %v472
        %v550 = vmul.f32 %v549, %v472
        %v551 = vmul.f32 %v550, %v549
        %v552 = vmul.f32 0.5, %v551
        %v553 = vsub.f32 1.5, %v552
        %v554 = vmul.f32 %v549, %v553
        %vm555 = vweird.f32 %v472
        %vm556 = vweird.f32 %v549
        %vm557 = vmor %vm555, %vm556
        %v558 = vsel %vm557, %v549, %v554
        %v559 = vrsqrt.pop %v473
        %v560 = vmul.f32 %v559, %v473
        %v561 = vmul.f32 %v560, %v559
        %v562 = vmul.f32 0.5, %v561
        %v563 = vsub.f32 1.5, %v562
        %v564 = vmul.f32 %v559, %v563
        %vm565 = vweird.f32 %v473
        %vm566 = vweird.f32 %v559
        %vm567 = vmor %vm565, %vm566
        %v568 = vsel %vm567, %v559, %v564
        %v569 = vrsqrt.pop %v474
        %v570 = vmul.f32 %v569, %v474
        %v571 = vmul.f32 %v570, %v569
        %v572 = vmul.f32 0.5, %v571
        %v573 = vsub.f32 1.5, %v572
        %v574 = vmul.f32 %v569, %v573
        %vm575 = vweird.f32 %v474
        %vm576 = vweird.f32 %v569
        %vm577 = vmor %vm575, %vm576
        %v578 = vsel %vm577, %v569, %v574
        %v579 = vrsqrt.pop %v475
        %v580 = vmul.f32 %v579, %v475
        %v581 = vmul.f32 %v580, %v579
        %v582 = vmul.f32 0.5, %v581
        %v583 = vsub.f32 1.5, %v582
        %v584 = vmul.f32 %v579, %v583
        %vm585 = vweird.f32 %v475
        %vm586 = vweird.f32 %v579
        %vm587 = vmor %vm585, %vm586
        %v588 = vsel %vm587, %v579, %v584
        %v589 = vrsqrt.pop %v476
        %v590 = vmul.f32 %v589, %v476
        %v591 = vmul.f32 %v590, %v589
        %v592 = vmul.f32 0.5, %v591
        %v593 = vsub.f32 1.5, %v592
        %v594 = vmul.f32 %v589, %v593
        %vm595 = vweird.f32 %v476
        %vm596 = vweird.f32 %v589
        %vm597 = vmor %vm595, %vm596
        %v598 = vsel %vm597, %v589, %v594
        %v599 = vrsqrt.pop %v477
        %v600 = vmul.f32 %v599, %v477
        %v601 = vmul.f32 %v600, %v599
        %v602 = vmul.f32 0.5, %v601
        %v603 = vsub.f32 1.5, %v602
        %v604 = vmul.f32 %v599, %v603
        %vm605 = vweird.f32 %v477
        %vm606 = vweird.f32 %v599
        %vm607 = vmor %vm605, %vm606
        %v608 = vsel %vm607, %v599, %v604
        %v609 = vrsqrt.pop %v478
        %v610 = vmul.f32 %v609, %v478
        %v611 = vmul.f32 %v610, %v609
        %v612 = vmul.f32 0.5, %v611
        %v613 = vsub.f32 1.5, %v612
        %v614 = vmul.f32 %v609, %v613
        %vm615 = vweird.f32 %v478
        %vm616 = vweird.f32 %v609
        %vm617 = vmor %vm615, %vm616
        %v618 = vsel %vm617, %v609, %v614
        %v619 = vrsqrt.pop %v479
        %v620 = vmul.f32 %v619, %v479
        %v621 = vmul.f32 %v620, %v619
        %v622 = vmul.f32 0.5, %v621
        %v623 = vsub.f32 1.5, %v622
        %v624 = vmul.f32 %v619, %v623
        %vm625 = vweird.f32 %v479
        %vm626 = vweird.f32 %v619
        %vm627 = vmor %vm625, %vm626
        %v628 = vsel %vm627, %v619, %v624
        %v629 = vrsqrt.pop %v480
        %v630 = vmul.f32 %v629, %v480
        %v631 = vmul.f32 %v630, %v629
        %v632 = vmul.f32 0.5, %v631
        %v633 = vsub.f32 1.5, %v632
        %v634 = vmul.f32 %v629, %v633
        %vm635 = vweird.f32 %v480
        %vm636 = vweird.f32 %v629
        %vm637 = vmor %vm635, %vm636
        %v638 = vsel %vm637, %v629, %v634
        %v639 = vrsqrt.pop %v481
        %v640 = vmul.f32 %v639, %v481
        %v641 = vmul.f32 %v640, %v639
        %v642 = vmul.f32 0.5, %v641
        %v643 = vsub.f32 1.5, %v642
        %v644 = vmul.f32 %v639, %v643
        %vm645 = vweird.f32 %v481
        %vm646 = vweird.f32 %v639
        %vm647 = vmor %vm645, %vm646
        %v648 = vsel %vm647, %v639, %v644
        %v649 = vrsqrt.pop %v482
        %v650 = vmul.f32 %v649, %v482
        %v651 = vmul.f32 %v650, %v649
        %v652 = vmul.f32 0.5, %v651
        %v653 = vsub.f32 1.5, %v652
        %v654 = vmul.f32 %v649, %v653
        %vm655 = vweird.f32 %v482
        %vm656 = vweird.f32 %v649
        %vm657 = vmor %vm655, %vm656
        %v658 = vsel %vm657, %v649, %v654
        %v659 = vrsqrt.pop %v483
        %v660 = vmul.f32 %v659, %v483
        %v661 = vmul.f32 %v660, %v659
        %v662 = vmul.f32 0.5, %v661
        %v663 = vsub.f32 1.5, %v662
        %v664 = vmul.f32 %v659, %v663
        %vm665 = vweird.f32 %v483
        %vm666 = vweird.f32 %v659
        %vm667 = vmor %vm665, %vm666
        %v668 = vsel %vm667, %v659, %v664
        %v669 = vrsqrt.pop %v484
        %v670 = vmul.f32 %v669, %v484
        %v671 = vmul.f32 %v670, %v669
        %v672 = vmul.f32 0.5, %v671
        %v673 = vsub.f32 1.5, %v672
        %v674 = vmul.f32 %v669, %v673
        %vm675 = vweird.f32 %v484
        %vm676 = vweird.f32 %v669
        %vm677 = vmor %vm675, %vm676
        %v678 = vsel %vm677, %v669, %v674
        %v679 = vrsqrt.pop %v485
        %v680 = vmul.f32 %v679, %v485
        %v681 = vmul.f32 %v680, %v679
        %v682 = vmul.f32 0.5, %v681
        %v683 = vsub.f32 1.5, %v682
        %v684 = vmul.f32 %v679, %v683
        %vm685 = vweird.f32 %v485
        %vm686 = vweird.f32 %v679
        %vm687 = vmor %vm685, %vm686
        %v688 = vsel %vm687, %v679, %v684
        %v689 = vrsqrt.pop %v486
        %v690 = vmul.f32 %v689, %v486
        %v691 = vmul.f32 %v690, %v689
        %v692 = vmul.f32 0.5, %v691
        %v693 = vsub.f32 1.5, %v692
        %v694 = vmul.f32 %v689, %v693
        %vm695 = vweird.f32 %v486
        %vm696 = vweird.f32 %v689
        %vm697 = vmor %vm695, %vm696
        %v698 = vsel %vm697, %v689, %v694
        %v699 = vrsqrt.pop %v487
        %v700 = vmul.f32 %v699, %v487
        %v701 = vmul.f32 %v700, %v699
        %v702 = vmul.f32 0.5, %v701
        %v703 = vsub.f32 1.5, %v702
        %v704 = vmul.f32 %v699, %v703
        %vm705 = vweird.f32 %v487
        %vm706 = vweird.f32 %v699
        %vm707 = vmor %vm705, %vm706
        %v708 = vsel %vm707, %v699, %v704
        %v709 = vrsqrt.pop %v488
        %v710 = vmul.f32 %v709, %v488
        %v711 = vmul.f32 %v710, %v709
        %v712 = vmul.f32 0.5, %v711
        %v713 = vsub.f32 1.5, %v712
        %v714 = vmul.f32 %v709, %v713
        %vm715 = vweird.f32 %v488
        %vm716 = vweird.f32 %v709
        %vm717 = vmor %vm715, %vm716
        %v718 = vsel %vm717, %v709, %v714
        %v719 = vrsqrt.pop %v489
        %v720 = vmul.f32 %v719, %v489
        %v721 = vmul.f32 %v720, %v719
        %v722 = vmul.f32 0.5, %v721
        %v723 = vsub.f32 1.5, %v722
        %v724 = vmul.f32 %v719, %v723
        %vm725 = vweird.f32 %v489
        %vm726 = vweird.f32 %v719
        %vm727 = vmor %vm725, %vm726
        %v728 = vsel %vm727, %v719, %v724
        %v729 = vrsqrt.pop %v490
        %v730 = vmul.f32 %v729, %v490
        %v731 = vmul.f32 %v730, %v729
        %v732 = vmul.f32 0.5, %v731
        %v733 = vsub.f32 1.5, %v732
        %v734 = vmul.f32 %v729, %v733
        %vm735 = vweird.f32 %v490
        %vm736 = vweird.f32 %v729
        %vm737 = vmor %vm735, %vm736
        %v738 = vsel %vm737, %v729, %v734
        %v739 = vrsqrt.pop %v491
        %v740 = vmul.f32 %v739, %v491
        %v741 = vmul.f32 %v740, %v739
        %v742 = vmul.f32 0.5, %v741
        %v743 = vsub.f32 1.5, %v742
        %v744 = vmul.f32 %v739, %v743
        %vm745 = vweird.f32 %v491
        %vm746 = vweird.f32 %v739
        %vm747 = vmor %vm745, %vm746
        %v748 = vsel %vm747, %v739, %v744
        %v749 = vrsqrt.pop %v492
        %v750 = vmul.f32 %v749, %v492
        %v751 = vmul.f32 %v750, %v749
        %v752 = vmul.f32 0.5, %v751
        %v753 = vsub.f32 1.5, %v752
        %v754 = vmul.f32 %v749, %v753
        %vm755 = vweird.f32 %v492
        %vm756 = vweird.f32 %v749
        %vm757 = vmor %vm755, %vm756
        %v758 = vsel %vm757, %v749, %v754
        %v759 = vrsqrt.pop %v493
        %v760 = vmul.f32 %v759, %v493
        %v761 = vmul.f32 %v760, %v759
        %v762 = vmul.f32 0.5, %v761
        %v763 = vsub.f32 1.5, %v762
        %v764 = vmul.f32 %v759, %v763
        %vm765 = vweird.f32 %v493
        %vm766 = vweird.f32 %v759
        %vm767 = vmor %vm765, %vm766
        %v768 = vsel %vm767, %v759, %v764
        %v769 = vrsqrt.pop %v494
        %v770 = vmul.f32 %v769, %v494
        %v771 = vmul.f32 %v770, %v769
        %v772 = vmul.f32 0.5, %v771
        %v773 = vsub.f32 1.5, %v772
        %v774 = vmul.f32 %v769, %v773
        %vm775 = vweird.f32 %v494
        %vm776 = vweird.f32 %v769
        %vm777 = vmor %vm775, %vm776
        %v778 = vsel %vm777, %v769, %v774
        %v779 = vrsqrt.pop %v495
        %v780 = vmul.f32 %v779, %v495
        %v781 = vmul.f32 %v780, %v779
        %v782 = vmul.f32 0.5, %v781
        %v783 = vsub.f32 1.5, %v782
        %v784 = vmul.f32 %v779, %v783
        %vm785 = vweird.f32 %v495
        %vm786 = vweird.f32 %v779
        %vm787 = vmor %vm785, %vm786
        %v788 = vsel %vm787, %v779, %v784
        %v789 = vrsqrt.pop %v496
        %v790 = vmul.f32 %v789, %v496
        %v791 = vmul.f32 %v790, %v789
        %v792 = vmul.f32 0.5, %v791
        %v793 = vsub.f32 1.5, %v792
        %v794 = vmul.f32 %v789, %v793
        %vm795 = vweird.f32 %v496
        %vm796 = vweird.f32 %v789
        %vm797 = vmor %vm795, %vm796
        %v798 = vsel %vm797, %v789, %v794
        %v799 = vrsqrt.pop %v497
        %v800 = vmul.f32 %v799, %v497
        %v801 = vmul.f32 %v800, %v799
        %v802 = vmul.f32 0.5, %v801
        %v803 = vsub.f32 1.5, %v802
        %v804 = vmul.f32 %v799, %v803
        %vm805 = vweird.f32 %v497
        %vm806 = vweird.f32 %v799
        %vm807 = vmor %vm805, %vm806
        %v808 = vsel %vm807, %v799, %v804
        %v809 = vrsqrt.pop %v498
        %v810 = vmul.f32 %v809, %v498
        %v811 = vmul.f32 %v810, %v809
        %v812 = vmul.f32 0.5, %v811
        %v813 = vsub.f32 1.5, %v812
        %v814 = vmul.f32 %v809, %v813
        %vm815 = vweird.f32 %v498
        %vm816 = vweird.f32 %v809
        %vm817 = vmor %vm815, %vm816
        %v818 = vsel %vm817, %v809, %v814
        %v819 = vmul.f32 %v307, %v508
        %v820 = vmul.f32 %v308, %v518
        %v821 = vmul.f32 %v309, %v528
        %v822 = vmul.f32 %v310, %v538
        %v823 = vmul.f32 %v311, %v548
        %v824 = vmul.f32 %v312, %v558
        %v825 = vmul.f32 %v313, %v568
        %v826 = vmul.f32 %v314, %v578
        %v827 = vmul.f32 %v315, %v588
        %v828 = vmul.f32 %v316, %v598
        %v829 = vmul.f32 %v317, %v608
        %v830 = vmul.f32 %v318, %v618
        %v831 = vmul.f32 %v319, %v628
        %v832 = vmul.f32 %v320, %v638
        %v833 = vmul.f32 %v321, %v648
        %v834 = vmul.f32 %v322, %v658
        %v835 = vmul.f32 %v323, %v668
        %v836 = vmul.f32 %v324, %v678
        %v837 = vmul.f32 %v325, %v688
        %v838 = vmul.f32 %v326, %v698
        %v839 = vmul.f32 %v327, %v708
        %v840 = vmul.f32 %v328, %v718
        %v841 = vmul.f32 %v329, %v728
        %v842 = vmul.f32 %v330, %v738
        %v843 = vmul.f32 %v331, %v748
        %v844 = vmul.f32 %v332, %v758
        %v845 = vmul.f32 %v333, %v768
        %v846 = vmul.f32 %v334, %v778
        %v847 = vmul.f32 %v335, %v788
        %v848 = vmul.f32 %v336, %v798
        %v849 = vmul.f32 %v337, %v808
        %v850 = vmul.f32 %v338, %v818
        %v851 = vld [vmem:[%s1] sm:$0xff]
        %v852 = vld [vmem:[%s1 + $0x8] sm:$0xff]
        %v853 = vld [vmem:[%s1 + $0x10] sm:$0xff]
        %v854 = vld [vmem:[%s1 + $0x18] sm:$0xff]
        %v855 = vld [vmem:[%s1 + $0x20] sm:$0xff]
        %v856 = vld [vmem:[%s1 + $0x28] sm:$0xff]
        %v857 = vld [vmem:[%s1 + $0x30] sm:$0xff]
        %v858 = vld [vmem:[%s1 + $0x38] sm:$0xff]
        %v859 = vld [vmem:[%s1 + $0x40] sm:$0xff]
        %v860 = vld [vmem:[%s1 + $0x48] sm:$0xff]
        %v861 = vld [vmem:[%s1 + $0x50] sm:$0xff]
        %v862 = vld [vmem:[%s1 + $0x58] sm:$0xff]
        %v863 = vld [vmem:[%s1 + $0x60] sm:$0xff]
        %v864 = vld [vmem:[%s1 + $0x68] sm:$0xff]
        %v865 = vld [vmem:[%s1 + $0x70] sm:$0xff]
        %v866 = vld [vmem:[%s1 + $0x78] sm:$0xff]
        %v867 = vld [vmem:[%s2] sm:$0x1]
        %v869 = vperm.slane %v867, 0
        %871 = vmatpush.msra.mxu0 %v866
        %872 = vmatpush.msra.mxu0 %v865
        %873 = vmatpush.msra.mxu0 %v864
        %874 = vmatpush.msra.mxu0 %v863
        %875 = vmatpush.msra.mxu0 %v862
        %876 = vmatpush.msra.mxu0 %v861
        %877 = vmatpush.msra.mxu0 %v860
        %878 = vmatpush.msra.mxu0 %v859
        %879 = vmatpush.msra.mxu0 %v858
        %880 = vmatpush.msra.mxu0 %v857
        %881 = vmatpush.msra.mxu0 %v856
        %882 = vmatpush.msra.mxu0 %v855
        %883 = vmatpush.msra.mxu0 %v854
        %884 = vmatpush.msra.mxu0 %v853
        %885 = vmatpush.msra.mxu0 %v852
        %886 = vmatpush.msra.mxu0 %v851
        %887 = vmatmul.f32.gmra.mxu0 %v819
        %v888 = vpop.f32.mrf.mxu0
        %v889 = vadd.f32 %v869, %v888
        %890 = vmatmul.f32.gmra.mxu0 %v820
        %v891 = vpop.f32.mrf.mxu0
        %v892 = vadd.f32 %v869, %v891
        %893 = vmatmul.f32.gmra.mxu0 %v821
        %v894 = vpop.f32.mrf.mxu0
        %v895 = vadd.f32 %v869, %v894
        %896 = vmatmul.f32.gmra.mxu0 %v822
        %v897 = vpop.f32.mrf.mxu0
        %v898 = vadd.f32 %v869, %v897
        %899 = vmatmul.f32.gmra.mxu0 %v823
        %v900 = vpop.f32.mrf.mxu0
        %v901 = vadd.f32 %v869, %v900
        %902 = vmatmul.f32.gmra.mxu0 %v824
        %v903 = vpop.f32.mrf.mxu0
        %v904 = vadd.f32 %v869, %v903
        %905 = vmatmul.f32.gmra.mxu0 %v825
        %v906 = vpop.f32.mrf.mxu0
        %v907 = vadd.f32 %v869, %v906
        %908 = vmatmul.f32.gmra.mxu0 %v826
        %v909 = vpop.f32.mrf.mxu0
        %v910 = vadd.f32 %v869, %v909
        %911 = vmatmul.f32.gmra.mxu0 %v827
        %v912 = vpop.f32.mrf.mxu0
        %v913 = vadd.f32 %v869, %v912
        %914 = vmatmul.f32.gmra.mxu0 %v828
        %v915 = vpop.f32.mrf.mxu0
        %v916 = vadd.f32 %v869, %v915
        %917 = vmatmul.f32.gmra.mxu0 %v829
        %v918 = vpop.f32.mrf.mxu0
        %v919 = vadd.f32 %v869, %v918
        %920 = vmatmul.f32.gmra.mxu0 %v830
        %v921 = vpop.f32.mrf.mxu0
        %v922 = vadd.f32 %v869, %v921
        %923 = vmatmul.f32.gmra.mxu0 %v831
        %v924 = vpop.f32.mrf.mxu0
        %v925 = vadd.f32 %v869, %v924
        %926 = vmatmul.f32.gmra.mxu0 %v832
        %v927 = vpop.f32.mrf.mxu0
        %v928 = vadd.f32 %v869, %v927
        %929 = vmatmul.f32.gmra.mxu0 %v833
        %v930 = vpop.f32.mrf.mxu0
        %v931 = vadd.f32 %v869, %v930
        %932 = vmatmul.f32.gmra.mxu0 %v834
        %v933 = vpop.f32.mrf.mxu0
        %v934 = vadd.f32 %v869, %v933
        %935 = vmatmul.f32.gmra.mxu0 %v835
        %v936 = vpop.f32.mrf.mxu0
        %v937 = vadd.f32 %v869, %v936
        %938 = vmatmul.f32.gmra.mxu0 %v836
        %v939 = vpop.f32.mrf.mxu0
        %v940 = vadd.f32 %v869, %v939
        %941 = vmatmul.f32.gmra.mxu0 %v837
        %v942 = vpop.f32.mrf.mxu0
        %v943 = vadd.f32 %v869, %v942
        %944 = vmatmul.f32.gmra.mxu0 %v838
        %v945 = vpop.f32.mrf.mxu0
        %v946 = vadd.f32 %v869, %v945
        %947 = vmatmul.f32.gmra.mxu0 %v839
        %v948 = vpop.f32.mrf.mxu0
        %v949 = vadd.f32 %v869, %v948
        %950 = vmatmul.f32.gmra.mxu0 %v840
        %v951 = vpop.f32.mrf.mxu0
        %v952 = vadd.f32 %v869, %v951
        %953 = vmatmul.f32.gmra.mxu0 %v841
        %v954 = vpop.f32.mrf.mxu0
        %v955 = vadd.f32 %v869, %v954
        %956 = vmatmul.f32.gmra.mxu0 %v842
        %v957 = vpop.f32.mrf.mxu0
        %v958 = vadd.f32 %v869, %v957
        %959 = vmatmul.f32.gmra.mxu0 %v843
        %v960 = vpop.f32.mrf.mxu0
        %v961 = vadd.f32 %v869, %v960
        %962 = vmatmul.f32.gmra.mxu0 %v844
        %v963 = vpop.f32.mrf.mxu0
        %v964 = vadd.f32 %v869, %v963
        %965 = vmatmul.f32.gmra.mxu0 %v845
        %v966 = vpop.f32.mrf.mxu0
        %v967 = vadd.f32 %v869, %v966
        %968 = vmatmul.f32.gmra.mxu0 %v846
        %v969 = vpop.f32.mrf.mxu0
        %v970 = vadd.f32 %v869, %v969
        %971 = vmatmul.f32.gmra.mxu0 %v847
        %v972 = vpop.f32.mrf.mxu0
        %v973 = vadd.f32 %v869, %v972
        %974 = vmatmul.f32.gmra.mxu0 %v848
        %v975 = vpop.f32.mrf.mxu0
        %v976 = vadd.f32 %v869, %v975
        %977 = vmatmul.f32.gmra.mxu0 %v849
        %v978 = vpop.f32.mrf.mxu0
        %v979 = vadd.f32 %v869, %v978
        %980 = vmatmul.f32.gmra.mxu0 %v850
        %v981 = vpop.f32.mrf.mxu0
        %v982 = vadd.f32 %v869, %v981
        %983 = vdwg.mxu0
        %v984 = vadd.f32 %v889, %v172
        %v985 = vadd.f32 %v892, %v173
        %v986 = vadd.f32 %v895, %v174
        %v987 = vadd.f32 %v898, %v175
        %v988 = vadd.f32 %v901, %v176
        %v989 = vadd.f32 %v904, %v177
        %v990 = vadd.f32 %v907, %v178
        %v991 = vadd.f32 %v910, %v179
        %v992 = vadd.f32 %v913, %v180
        %v993 = vadd.f32 %v916, %v181
        %v994 = vadd.f32 %v919, %v182
        %v995 = vadd.f32 %v922, %v183
        %v996 = vadd.f32 %v925, %v184
        %v997 = vadd.f32 %v928, %v185
        %v998 = vadd.f32 %v931, %v186
        %v999 = vadd.f32 %v934, %v187
        %v1000 = vadd.f32 %v937, %v188
        %v1001 = vadd.f32 %v940, %v189
        %v1002 = vadd.f32 %v943, %v190
        %v1003 = vadd.f32 %v946, %v191
        %v1004 = vadd.f32 %v949, %v192
        %v1005 = vadd.f32 %v952, %v193
        %v1006 = vadd.f32 %v955, %v194
        %v1007 = vadd.f32 %v958, %v195
        %v1008 = vadd.f32 %v961, %v196
        %v1009 = vadd.f32 %v964, %v197
        %v1010 = vadd.f32 %v967, %v198
        %v1011 = vadd.f32 %v970, %v199
        %v1012 = vadd.f32 %v973, %v200
        %v1013 = vadd.f32 %v976, %v201
        %v1014 = vadd.f32 %v979, %v202
        %v1015 = vadd.f32 %v982, %v203
        %1016 = vst [vmem:[%s164] sm:$0xff] %v984
        %1017 = vst [vmem:[%s164 + $0x8] sm:$0xff] %v985
        %1018 = vst [vmem:[%s164 + $0x10] sm:$0xff] %v986
        %1019 = vst [vmem:[%s164 + $0x18] sm:$0xff] %v987
        %1020 = vst [vmem:[%s164 + $0x20] sm:$0xff] %v988
        %1021 = vst [vmem:[%s164 + $0x28] sm:$0xff] %v989
        %1022 = vst [vmem:[%s164 + $0x30] sm:$0xff] %v990
        %1023 = vst [vmem:[%s164 + $0x38] sm:$0xff] %v991
        %1024 = vst [vmem:[%s164 + $0x40] sm:$0xff] %v992
        %1025 = vst [vmem:[%s164 + $0x48] sm:$0xff] %v993
        %1026 = vst [vmem:[%s164 + $0x50] sm:$0xff] %v994
        %1027 = vst [vmem:[%s164 + $0x58] sm:$0xff] %v995
        %1028 = vst [vmem:[%s164 + $0x60] sm:$0xff] %v996
        %1029 = vst [vmem:[%s164 + $0x68] sm:$0xff] %v997
        %1030 = vst [vmem:[%s164 + $0x70] sm:$0xff] %v998
        %1031 = vst [vmem:[%s164 + $0x78] sm:$0xff] %v999
        %1032 = vst [vmem:[%s164 + $0x80] sm:$0xff] %v1000
        %1033 = vst [vmem:[%s164 + $0x88] sm:$0xff] %v1001
        %1034 = vst [vmem:[%s164 + $0x90] sm:$0xff] %v1002
        %1035 = vst [vmem:[%s164 + $0x98] sm:$0xff] %v1003
        %1036 = vst [vmem:[%s164 + $0xa0] sm:$0xff] %v1004
        %1037 = vst [vmem:[%s164 + $0xa8] sm:$0xff] %v1005
        %1038 = vst [vmem:[%s164 + $0xb0] sm:$0xff] %v1006
        %1039 = vst [vmem:[%s164 + $0xb8] sm:$0xff] %v1007
        %1040 = vst [vmem:[%s164 + $0xc0] sm:$0xff] %v1008
        %1041 = vst [vmem:[%s164 + $0xc8] sm:$0xff] %v1009
        %1042 = vst [vmem:[%s164 + $0xd0] sm:$0xff] %v1010
        %1043 = vst [vmem:[%s164 + $0xd8] sm:$0xff] %v1011
        %1044 = vst [vmem:[%s164 + $0xe0] sm:$0xff] %v1012
        %1045 = vst [vmem:[%s164 + $0xe8] sm:$0xff] %v1013
        %1046 = vst [vmem:[%s164 + $0xf0] sm:$0xff] %v1014
        %1047 = vst [vmem:[%s164 + $0xf8] sm:$0xff] %v1015
        %s1048 = sand.u32 %s93, 1
        %s1049 = scalar_lea.sflag [#allocation3], %s1048
        %s1050 = sand.u32 %s93, 1
        %s1051 = smul.addr %s1050, 256
        %s1052 = scalar_lea.vmem [#allocation2], %s1051
        // Predicated region
        $region33: #{residual_forward.1} parent=31 // pred_check
          %p1053 = pneg %p103
        $region34: #{residual_forward.1} parent=31 // pred_check_branch
          %1055 = sbr.rel (%p1053) target = $region36
        $region35: #{residual_forward.1} parent=31 // pred_region
          %s1056 = smul.u32 32, %s17
          %1058 = vsyncadd %s1049, 0
          %s1059 = smul.addr %s1056, 8
          %s1060 = scalar_lea.hbm %s3, %s1059
          %s1061 = sshll.u32 %s1052, 4
          %s1062 = int_to_ptr.vmem [resolvable:$true] %s1061
          %s1063 = sshll.u32 %s1060, 4
          %s1064 = int_to_ptr.hbm [resolvable:$true] %s1063
          %1069 = dma.vmem_to_hbm [thread:$0]  %s1062, 4096, %s1064, %s1049, 128, 128, 8
        $region36: #{residual_forward.1} parent=31 // pred_fallthru
          _
      $region32: #{residual_forward.1} parent=5 // pred_fallthru
        _
      %p1070 = scmp.le.s32.totalorder 2, %s12
      // Predicated region
      $region37: #{residual_forward.1} parent=5 // pred_check
        %p1071 = pneg %p1070
      $region38: #{residual_forward.1} parent=5 // pred_check_branch
        %1073 = sbr.rel (%p1071) target = $region40
      $region39: #{residual_forward.1} parent=5 // pred_region
        %s1074 = ssub.s32 %s12, 2
        // Predicated region
        $region41: #{residual_forward.1} parent=39 // pred_check
          %p1075 = pneg %p109
        $region42: #{residual_forward.1} parent=39 // pred_check_branch
          %1077 = sbr.rel (%p1075) target = $region44
        $region43: #{residual_forward.1} parent=39 // pred_region
          %s1078 = sand.u32 %s94, 1
          %s1079 = scalar_lea.sflag [#allocation3], %s1078
          %s1080 = sand.u32 %s94, 1
          %s1081 = smul.addr %s1080, 256
          %s1082 = scalar_lea.vmem [#allocation2], %s1081
          %1084 = dma.done %s1079, 4096
        $region44: #{residual_forward.1} parent=39 // pred_fallthru
          _
      $region40: #{residual_forward.1} parent=5 // pred_fallthru
        _
    $region6: #{residual_forward.1} parent=1 // loop_footer
      %s16 = sadd.s32 1, %s12
    $region7: #{residual_forward.1} parent=1 // loop_footer_branch
      %11 = sbr.rel target = $region3
    $region8: #{residual_forward.1} parent=1 // loop_exit
      _
    %1085 = vsyncpa [#allocation3], 1
    %s1086 = scalar_lea.sflag [#allocation3], 1
    %1087 = vsyncpa %s1086, 1

</llo_original>
